<compile_context>
chip_gen: v7x
topology: tpu7x:2x2x1
jax: 0.10.0
libtpu: 0.0.40
codegen_flags: <defaults>
</compile_context>

<pallas_src>
import math
import functools

import jax
import jax.numpy as jnp
from jax.experimental import pallas as pl
from jax.experimental.pallas import tpu as pltpu


# ----------------------------- Pallas kernel -----------------------------

def _qconv3x3_lif_kernel(x_ref, w_ref, prm_ref, out_ref, mem_ref, *, H, W, tau):
    """One (image n, timestep t) grid step: fused 3x3 conv (9 shifted-tap matmuls) + LIF update.

    x_ref  : (1, 1, Cin, (H+3)*(W+2))  bf16  one padded image, spatial flattened (lane dim)
    w_ref  : (9, Cout, Cin)            bf16  integer-level quantized weight taps (kh*3+kw)
    prm_ref: (3,)                      f32   SMEM scalars: [beta, bias, thresh]
    out_ref: (1, 1, Cout, H*(W+2))     bf16  binary spikes on the W-padded output grid
    mem_ref: (Cout, H*(W+2))           f32   persistent membrane state (carried over the T axis)
    """
    Wp = W + 2
    HWp = H * Wp
    cout = out_ref.shape[2]

    beta = prm_ref[0]
    bias = prm_ref[1]
    thresh = prm_ref[2]

    # New image (t == 0): reset the membrane.
    @pl.when(pl.program_id(1) == 0)
    def _():
        mem_ref[...] = jnp.zeros_like(mem_ref)

    # Load the padded image once; the 9 taps are static lane-window slices of it.
    x2d = x_ref[0, 0]                                      # (Cin, (H+3)*Wp) bf16

    # conv2d(stride=1, pad=1) == sum over the 9 taps of  W_tap @ x shifted by kh*Wp + kw.
    # Output columns j = h*Wp + w; columns w in {W, W+1} are halo garbage, cropped in the wrapper.
    cur = jnp.zeros((cout, HWp), jnp.float32)
    for kh in range(3):
        for kw in range(3):
            off = kh * Wp + kw
            slab = x2d[:, off:off + HWp]                   # (Cin, H*Wp)
            cur = cur + jnp.dot(w_ref[kh * 3 + kw], slab,
                                preferred_element_type=jnp.float32)

    # LIF recurrence step in f32 (no bf16 elementwise on v5e); shared scale beta applied here,
    # so no assumption on the sign of beta is needed.
    mem = tau * mem_ref[...] + cur
    spike = (mem * beta + bias >= thresh).astype(jnp.float32)   # heaviside(mem*beta + bias - thresh)
    out_ref[0, 0] = spike.astype(out_ref.dtype)                 # lane-dense (H*Wp wide) store
    mem_ref[...] = mem - spike * mem                            # hard reset


# ----------------------------- wrapper (glue) -----------------------------

def qconv2d_lif_forward(x, weight, beta, *, num_bits_w=4, num_bits_u=4,
                        thresh=1.0, tau=0.5, lif_bias=0.0,
                        compute_dtype=jnp.bfloat16):
    T, N, Cin, H, W = x.shape
    Cout, Cin_w, KH, KW = weight.shape
    assert Cin_w == Cin and KH == 3 and KW == 3, "3x3, stride=1, padding=1 conv assumed"
    # bf16 holds the integer weight levels exactly only up to |q| <= 256.
    assert num_bits_w <= 9, "integer-level weights must be exactly representable in bf16"

    Wp = W + 2                 # W-halo kept through the kernel, cropped at the end
    Hp = H + 3                 # +1 top halo, +1 bottom halo, +1 extra row so every
    #                            shifted lane window of length H*Wp stays in bounds
    L = Hp * Wp
    HWp = H * Wp

    # Single pad + cast pass over the input (XLA fuses); reshape of the last two dims is free.
    xp = jnp.pad(x, ((0, 0), (0, 0), (0, 0), (1, 2), (1, 1))).astype(compute_dtype)
    xp = xp.reshape(T, N, Cin, L)

    # MINT shared-scale w_q -> integer-level weights. Tiny op: plain JAX.
    q_levels = float(2 ** (num_bits_w - 1) - 1)
    qw = jnp.round(jnp.clip(jnp.tanh(weight.astype(jnp.float32)) / beta, -1.0, 1.0) * q_levels)
    w_taps = qw.transpose(2, 3, 0, 1).reshape(9, Cout, Cin).astype(compute_dtype)

    prm = jnp.stack([jnp.asarray(beta, jnp.float32),
                     jnp.asarray(lif_bias, jnp.float32),
                     jnp.asarray(thresh, jnp.float32)])

    # Per-step VMEM budget: double-buffered input/weight/output blocks + persistent membrane
    # scratch + slack for the f32 accumulator / tap temporaries. Stays tiny even for large
    # Cin/Cout, so a 32-48 MiB limit is safe on v5e (16 MiB scoped default), v6e and v7x (64 MiB).
    est = (2 * Cin * L * 2 + 2 * 9 * Cout * Cin * 2
           + 2 * Cout * HWp * 2 + Cout * HWp * 4 + (2 << 20))
    vmem_limit = int(min(48 << 20, max(32 << 20, 4 * est)))

    spikes_p = pl.pallas_call(
        functools.partial(_qconv3x3_lif_kernel, H=H, W=W, tau=float(tau)),
        out_shape=jax.ShapeDtypeStruct((T, N, Cout, HWp), compute_dtype),
        grid=(N, T),                                   # N parallel images x T sequential steps
        in_specs=[
            pl.BlockSpec((1, 1, Cin, L), lambda n, t: (t, n, 0, 0)),
            pl.BlockSpec((9, Cout, Cin), lambda n, t: (0, 0, 0)),
            pl.BlockSpec(memory_space=pltpu.MemorySpace.SMEM),
        ],
        out_specs=pl.BlockSpec((1, 1, Cout, HWp), lambda n, t: (t, n, 0, 0)),
        scratch_shapes=[pltpu.VMEM((Cout, HWp), jnp.float32)],   # membrane, carried over t
        compiler_params=pltpu.CompilerParams(
            dimension_semantics=("parallel", "arbitrary"),
            vmem_limit_bytes=vmem_limit),
    )(xp, w_taps, prm)

    # Drop the W-halo columns. Output is already NCHW-ordered; spikes are exactly {0, 1} (bf16).
    # (Optional knobs if still DMA-exposed: pipeline_mode=pl.Buffered(3) on the input spec,
    #  or int8 spikes if the consumer accepts them.)
    return spikes_p.reshape(T, N, Cout, H, Wp)[..., :W]


# ----------------------------- demo -----------------------------

if __name__ == "__main__":
    T, N, Cin, Cout, H, W = 8, 4, 4, 8, 16, 16
    num_bits_w, num_bits_u = 4, 4

    key = jax.random.PRNGKey(0)
    kx, kw = jax.random.split(key)
    x = jax.random.normal(kx, (T, N, Cin, H, W), jnp.float32)
    weight = 0.1 * jax.random.normal(kw, (Cout, Cin, 3, 3), jnp.float32)

    # initial_beta = mean(|W|) * 2 / sqrt(2^(bw-1) - 1)   (parameter setup, plain JAX)
    beta = jnp.abs(weight).mean() * 2.0 / math.sqrt(2 ** (num_bits_w - 1) - 1)

    fwd = jax.jit(functools.partial(qconv2d_lif_forward,
                                    num_bits_w=num_bits_w, num_bits_u=num_bits_u))
    s = fwd(x, weight, beta)
    s = jax.block_until_ready(s)

    assert s.shape == (T, N, Cout, H, W)
    assert bool(jnp.all((s == 0.0) | (s == 1.0)))           # LIF output is binary spikes
    rate = float(jnp.mean(s.astype(jnp.float32)))
    assert 0.0 < rate < 1.0                                 # some neurons spike, not all
    print("KERNEL_OK")
</pallas_src>

<mosaic_0001>
module attributes {stable_mosaic.version = 11 : i64} {
  func.func @_qconv3x3_lif_kernel(%arg0: i32, %arg1: i32, %arg2: memref<1x1x4x342xbf16, #tpu.memory_space<vmem>>, %arg3: memref<9x8x4xbf16, #tpu.memory_space<vmem>>, %arg4: memref<3xf32, #tpu.memory_space<smem>>, %arg5: memref<1x1x8x288xbf16, #tpu.memory_space<vmem>>, %arg6: memref<8x288xf32, #tpu.memory_space<vmem>>) attributes {dimension_semantics = [#tpu.dimension_semantics<parallel>, #tpu.dimension_semantics<arbitrary>], iteration_bounds = array<i64: 4, 8>, scalar_prefetch = 0 : i64, scratch_operands = 1 : i64, tpu.core_type = #tpu.core_type<tc>, window_params = [{transform_indices = @transform_0, window_bounds = array<i64: 1, 1, 4, 342>}, {pipeline_mode = #tpu.pipeline_mode<synchronous>, transform_indices = @transform_1, window_bounds = array<i64: 9, 8, 4>}, {transform_indices = @transform_2, window_bounds = array<i64: 3>}, {transform_indices = @transform_3, window_bounds = array<i64: 1, 1, 8, 288>}]} {
    %c0 = arith.constant 0 : index
    %0 = memref.load %arg4[%c0] : memref<3xf32, #tpu.memory_space<smem>>
    %c1 = arith.constant 1 : index
    %1 = memref.load %arg4[%c1] : memref<3xf32, #tpu.memory_space<smem>>
    %c2 = arith.constant 2 : index
    %2 = memref.load %arg4[%c2] : memref<3xf32, #tpu.memory_space<smem>>
    %c0_i32 = arith.constant 0 : i32
    %3 = arith.cmpi eq, %arg1, %c0_i32 : i32
    %4 = arith.extui %3 : i1 to i32
    %c0_i32_0 = arith.constant 0 : i32
    %5 = arith.cmpi ne, %4, %c0_i32_0 : i32
    scf.if %5 {
      %cst_44 = arith.constant 0.000000e+00 : f32
      %73 = vector.broadcast %cst_44 : f32 to vector<8x288xf32>
      %c0_45 = arith.constant 0 : index
      %c0_46 = arith.constant 0 : index
      %74 = vector.load %arg6[%c0_45, %c0_46] : memref<8x288xf32, #tpu.memory_space<vmem>>, vector<8x288xf32>
      tpu.vector_store %arg6[%c0_45, %c0_46], %73 {strides = array<i32>} : memref<8x288xf32, #tpu.memory_space<vmem>>, vector<8x288xf32>,
    } else {
    }
    %c0_1 = arith.constant 0 : index
    %c0_2 = arith.constant 0 : index
    %c0_3 = arith.constant 0 : index
    %c0_4 = arith.constant 0 : index
    %6 = vector.load %arg2[%c0_1, %c0_2, %c0_3, %c0_4] : memref<1x1x4x342xbf16, #tpu.memory_space<vmem>>, vector<1x1x4x342xbf16>
    %7 = vector.shape_cast %6 : vector<1x1x4x342xbf16> to vector<4x342xbf16>
    %cst = arith.constant 0.000000e+00 : f32
    %8 = vector.broadcast %cst : f32 to vector<8x288xf32>
    %9 = vector.extract_strided_slice %7 {offsets = [0, 0], sizes = [4, 288], strides = [1, 1]} : vector<4x342xbf16> to vector<4x288xbf16>
    %c0_5 = arith.constant 0 : index
    %c0_6 = arith.constant 0 : index
    %c0_7 = arith.constant 0 : index
    %10 = vector.load %arg3[%c0_5, %c0_6, %c0_7] : memref<9x8x4xbf16, #tpu.memory_space<vmem>>, vector<1x8x4xbf16>
    %11 = vector.shape_cast %10 : vector<1x8x4xbf16> to vector<8x4xbf16>
    %cst_8 = arith.constant dense<0.000000e+00> : vector<8x288xf32>
    %12 = tpu.matmul %11, %9, %cst_8 {dimension_numbers = #tpu.dot_dimension_numbers<[1], [0], [0], [1], [0, 0, 1, 1], [], []>} : vector<8x4xbf16>, vector<4x288xbf16>, vector<8x288xf32> -> vector<8x288xf32>
    %13 = arith.addf %8, %12 : vector<8x288xf32>
    %14 = vector.extract_strided_slice %7 {offsets = [0, 1], sizes = [4, 288], strides = [1, 1]} : vector<4x342xbf16> to vector<4x288xbf16>
    %c1_9 = arith.constant 1 : index
    %c0_10 = arith.constant 0 : index
    %c0_11 = arith.constant 0 : index
    %15 = vector.load %arg3[%c1_9, %c0_10, %c0_11] : memref<9x8x4xbf16, #tpu.memory_space<vmem>>, vector<1x8x4xbf16>
    %16 = vector.shape_cast %15 : vector<1x8x4xbf16> to vector<8x4xbf16>
    %cst_12 = arith.constant dense<0.000000e+00> : vector<8x288xf32>
    %17 = tpu.matmul %16, %14, %cst_12 {dimension_numbers = #tpu.dot_dimension_numbers<[1], [0], [0], [1], [0, 0, 1, 1], [], []>} : vector<8x4xbf16>, vector<4x288xbf16>, vector<8x288xf32> -> vector<8x288xf32>
    %18 = arith.addf %13, %17 : vector<8x288xf32>
    %19 = vector.extract_strided_slice %7 {offsets = [0, 2], sizes = [4, 288], strides = [1, 1]} : vector<4x342xbf16> to vector<4x288xbf16>
    %c2_13 = arith.constant 2 : index
    %c0_14 = arith.constant 0 : index
    %c0_15 = arith.constant 0 : index
    %20 = vector.load %arg3[%c2_13, %c0_14, %c0_15] : memref<9x8x4xbf16, #tpu.memory_space<vmem>>, vector<1x8x4xbf16>
    %21 = vector.shape_cast %20 : vector<1x8x4xbf16> to vector<8x4xbf16>
    %cst_16 = arith.constant dense<0.000000e+00> : vector<8x288xf32>
    %22 = tpu.matmul %21, %19, %cst_16 {dimension_numbers = #tpu.dot_dimension_numbers<[1], [0], [0], [1], [0, 0, 1, 1], [], []>} : vector<8x4xbf16>, vector<4x288xbf16>, vector<8x288xf32> -> vector<8x288xf32>
    %23 = arith.addf %18, %22 : vector<8x288xf32>
    %24 = vector.extract_strided_slice %7 {offsets = [0, 18], sizes = [4, 288], strides = [1, 1]} : vector<4x342xbf16> to vector<4x288xbf16>
    %c3 = arith.constant 3 : index
    %c0_17 = arith.constant 0 : index
    %c0_18 = arith.constant 0 : index
    %25 = vector.load %arg3[%c3, %c0_17, %c0_18] : memref<9x8x4xbf16, #tpu.memory_space<vmem>>, vector<1x8x4xbf16>
    %26 = vector.shape_cast %25 : vector<1x8x4xbf16> to vector<8x4xbf16>
    %cst_19 = arith.constant dense<0.000000e+00> : vector<8x288xf32>
    %27 = tpu.matmul %26, %24, %cst_19 {dimension_numbers = #tpu.dot_dimension_numbers<[1], [0], [0], [1], [0, 0, 1, 1], [], []>} : vector<8x4xbf16>, vector<4x288xbf16>, vector<8x288xf32> -> vector<8x288xf32>
    %28 = arith.addf %23, %27 : vector<8x288xf32>
    %29 = vector.extract_strided_slice %7 {offsets = [0, 19], sizes = [4, 288], strides = [1, 1]} : vector<4x342xbf16> to vector<4x288xbf16>
    %c4 = arith.constant 4 : index
    %c0_20 = arith.constant 0 : index
    %c0_21 = arith.constant 0 : index
    %30 = vector.load %arg3[%c4, %c0_20, %c0_21] : memref<9x8x4xbf16, #tpu.memory_space<vmem>>, vector<1x8x4xbf16>
    %31 = vector.shape_cast %30 : vector<1x8x4xbf16> to vector<8x4xbf16>
    %cst_22 = arith.constant dense<0.000000e+00> : vector<8x288xf32>
    %32 = tpu.matmul %31, %29, %cst_22 {dimension_numbers = #tpu.dot_dimension_numbers<[1], [0], [0], [1], [0, 0, 1, 1], [], []>} : vector<8x4xbf16>, vector<4x288xbf16>, vector<8x288xf32> -> vector<8x288xf32>
    %33 = arith.addf %28, %32 : vector<8x288xf32>
    %34 = vector.extract_strided_slice %7 {offsets = [0, 20], sizes = [4, 288], strides = [1, 1]} : vector<4x342xbf16> to vector<4x288xbf16>
    %c5 = arith.constant 5 : index
    %c0_23 = arith.constant 0 : index
    %c0_24 = arith.constant 0 : index
    %35 = vector.load %arg3[%c5, %c0_23, %c0_24] : memref<9x8x4xbf16, #tpu.memory_space<vmem>>, vector<1x8x4xbf16>
    %36 = vector.shape_cast %35 : vector<1x8x4xbf16> to vector<8x4xbf16>
    %cst_25 = arith.constant dense<0.000000e+00> : vector<8x288xf32>
    %37 = tpu.matmul %36, %34, %cst_25 {dimension_numbers = #tpu.dot_dimension_numbers<[1], [0], [0], [1], [0, 0, 1, 1], [], []>} : vector<8x4xbf16>, vector<4x288xbf16>, vector<8x288xf32> -> vector<8x288xf32>
    %38 = arith.addf %33, %37 : vector<8x288xf32>
    %39 = vector.extract_strided_slice %7 {offsets = [0, 36], sizes = [4, 288], strides = [1, 1]} : vector<4x342xbf16> to vector<4x288xbf16>
    %c6 = arith.constant 6 : index
    %c0_26 = arith.constant 0 : index
    %c0_27 = arith.constant 0 : index
    %40 = vector.load %arg3[%c6, %c0_26, %c0_27] : memref<9x8x4xbf16, #tpu.memory_space<vmem>>, vector<1x8x4xbf16>
    %41 = vector.shape_cast %40 : vector<1x8x4xbf16> to vector<8x4xbf16>
    %cst_28 = arith.constant dense<0.000000e+00> : vector<8x288xf32>
    %42 = tpu.matmul %41, %39, %cst_28 {dimension_numbers = #tpu.dot_dimension_numbers<[1], [0], [0], [1], [0, 0, 1, 1], [], []>} : vector<8x4xbf16>, vector<4x288xbf16>, vector<8x288xf32> -> vector<8x288xf32>
    %43 = arith.addf %38, %42 : vector<8x288xf32>
    %44 = vector.extract_strided_slice %7 {offsets = [0, 37], sizes = [4, 288], strides = [1, 1]} : vector<4x342xbf16> to vector<4x288xbf16>
    %c7 = arith.constant 7 : index
    %c0_29 = arith.constant 0 : index
    %c0_30 = arith.constant 0 : index
    %45 = vector.load %arg3[%c7, %c0_29, %c0_30] : memref<9x8x4xbf16, #tpu.memory_space<vmem>>, vector<1x8x4xbf16>
    %46 = vector.shape_cast %45 : vector<1x8x4xbf16> to vector<8x4xbf16>
    %cst_31 = arith.constant dense<0.000000e+00> : vector<8x288xf32>
    %47 = tpu.matmul %46, %44, %cst_31 {dimension_numbers = #tpu.dot_dimension_numbers<[1], [0], [0], [1], [0, 0, 1, 1], [], []>} : vector<8x4xbf16>, vector<4x288xbf16>, vector<8x288xf32> -> vector<8x288xf32>
    %48 = arith.addf %43, %47 : vector<8x288xf32>
    %49 = vector.extract_strided_slice %7 {offsets = [0, 38], sizes = [4, 288], strides = [1, 1]} : vector<4x342xbf16> to vector<4x288xbf16>
    %c8 = arith.constant 8 : index
    %c0_32 = arith.constant 0 : index
    %c0_33 = arith.constant 0 : index
    %50 = vector.load %arg3[%c8, %c0_32, %c0_33] : memref<9x8x4xbf16, #tpu.memory_space<vmem>>, vector<1x8x4xbf16>
    %51 = vector.shape_cast %50 : vector<1x8x4xbf16> to vector<8x4xbf16>
    %cst_34 = arith.constant dense<0.000000e+00> : vector<8x288xf32>
    %52 = tpu.matmul %51, %49, %cst_34 {dimension_numbers = #tpu.dot_dimension_numbers<[1], [0], [0], [1], [0, 0, 1, 1], [], []>} : vector<8x4xbf16>, vector<4x288xbf16>, vector<8x288xf32> -> vector<8x288xf32>
    %53 = arith.addf %48, %52 : vector<8x288xf32>
    %c0_35 = arith.constant 0 : index
    %c0_36 = arith.constant 0 : index
    %54 = vector.load %arg6[%c0_35, %c0_36] : memref<8x288xf32, #tpu.memory_space<vmem>>, vector<8x288xf32>
    %cst_37 = arith.constant 5.000000e-01 : f32
    %55 = vector.broadcast %cst_37 : f32 to vector<8x288xf32>
    %56 = arith.mulf %55, %54 : vector<8x288xf32>
    %57 = arith.addf %56, %53 : vector<8x288xf32>
    %58 = vector.broadcast %0 : f32 to vector<8x288xf32>
    %59 = arith.mulf %57, %58 : vector<8x288xf32>
    %60 = vector.broadcast %1 : f32 to vector<8x288xf32>
    %61 = arith.addf %59, %60 : vector<8x288xf32>
    %62 = vector.broadcast %2 : f32 to vector<8x288xf32>
    %63 = arith.cmpf oge, %61, %62 : vector<8x288xf32>
    %64 = arith.extui %63 : vector<8x288xi1> to vector<8x288xi32>
    %65 = arith.sitofp %64 : vector<8x288xi32> to vector<8x288xf32>
    %66 = arith.truncf %65 : vector<8x288xf32> to vector<8x288xbf16>
    %c0_38 = arith.constant 0 : index
    %c0_39 = arith.constant 0 : index
    %c0_40 = arith.constant 0 : index
    %c0_41 = arith.constant 0 : index
    %67 = vector.load %arg5[%c0_38, %c0_39, %c0_40, %c0_41] : memref<1x1x8x288xbf16, #tpu.memory_space<vmem>>, vector<1x1x8x288xbf16>
    %68 = vector.shape_cast %67 : vector<1x1x8x288xbf16> to vector<8x288xbf16>
    %69 = vector.shape_cast %66 : vector<8x288xbf16> to vector<1x1x8x288xbf16>
    tpu.vector_store %arg5[%c0_38, %c0_39, %c0_40, %c0_41], %69 {strides = array<i32>} : memref<1x1x8x288xbf16, #tpu.memory_space<vmem>>, vector<1x1x8x288xbf16>,
    %70 = arith.mulf %65, %57 : vector<8x288xf32>
    %71 = arith.subf %57, %70 : vector<8x288xf32>
    %c0_42 = arith.constant 0 : index
    %c0_43 = arith.constant 0 : index
    %72 = vector.load %arg6[%c0_42, %c0_43] : memref<8x288xf32, #tpu.memory_space<vmem>>, vector<8x288xf32>
    tpu.vector_store %arg6[%c0_42, %c0_43], %71 {strides = array<i32>} : memref<8x288xf32, #tpu.memory_space<vmem>>, vector<8x288xf32>,
    return
  }
  func.func @transform_0(%arg0: i32, %arg1: i32) -> (i32, i32, i32, i32) {
    %c0_i32 = arith.constant 0 : i32
    %c0_i32_0 = arith.constant 0 : i32
    %c0_i32_1 = arith.constant 0 : i32
    return %arg1, %arg0, %c0_i32, %c0_i32_0 : i32, i32, i32, i32
  }
  func.func @transform_1(%arg0: i32, %arg1: i32) -> (i32, i32, i32) {
    %c0_i32 = arith.constant 0 : i32
    %c0_i32_0 = arith.constant 0 : i32
    %c0_i32_1 = arith.constant 0 : i32
    %c0_i32_2 = arith.constant 0 : i32
    return %c0_i32, %c0_i32_0, %c0_i32_1 : i32, i32, i32
  }
  func.func @transform_2(%arg0: i32, %arg1: i32) -> i32 {
    %c0_i32 = arith.constant 0 : i32
    %c0_i32_0 = arith.constant 0 : i32
    return %c0_i32 : i32
  }
  func.func @transform_3(%arg0: i32, %arg1: i32) -> (i32, i32, i32, i32) {
    %c0_i32 = arith.constant 0 : i32
    %c0_i32_0 = arith.constant 0 : i32
    %c0_i32_1 = arith.constant 0 : i32
    return %arg1, %arg0, %c0_i32, %c0_i32_0 : i32, i32, i32, i32
  }
}

</mosaic_0001>

<llo_original>
// kernel: qconv2d_lif_forward.1
$region0: #{qconv2d_lif_forward.1}
  #allocation0 [shape = 'u32[]', space=smem, size = 0x4, offset = 0x4, fixed_abs, tag = 'smem constant byte address 0x4 - core index']
  #allocation1 [shape = 'u32[144,128]{1,0:T(1,128)}', space=vmem, size = 0x12000, scoped, tag = 'internal scratch']
  #allocation2 [shape = 'f32[8,288]{1,0:T(8,128)}', space=vmem, size = 0x3000, scoped, tag = 'scratch operand']
  %s0 = inlined_call_operand.vmem [shape: bf16[8,4,4,342], index: 0, kind: input, shape index: {}]
  %s1 = inlined_call_operand.vmem [shape: bf16[9,8,4], index: 1, kind: input, shape index: {}]
  %s2 = inlined_call_operand.vmem [shape: f32[3], index: 2, kind: input, shape index: {}]
  %s3 = inlined_call_operand.vmem [shape: bf16[8,4,8,288], index: 3, kind: output, shape index: {}]
  %s4 = sld [smem:[#allocation0]]
  $region53: #{qconv2d_lif_forward.1} parent=0
    _
  %s6 = ssub.s32 1, %s4
  %s7 = scalar_select 0, %s6, %s4
  $region1: #{qconv2d_lif_forward.1} parent=0
    #allocation3 [shape = 'u8[512]{0}', space=smem, size = 0x200, scoped, tag = 'input window, operand 2, single buffered']
    #allocation4 [shape = 's32[2]{0}', space=sflag, size = 0x8, scoped, tag = 'scoped memory for qconv2d_lif_forward.1']
    %8 = vsyncpa [#allocation4], 0
    loop: start=0, step=1, limit=34
    $region2: #{qconv2d_lif_forward.1} parent=1 // loop_pre_header
      _
    $region3: #{qconv2d_lif_forward.1} parent=1 // loop_header
      %s10 = sphi 0, %s14
      %p11 = scmp.ge.s32.totalorder %s10, 34
      %s17 = sphi 0, %s29
      %s18 = sphi 0, %s25
      %s19 = sphi 0, %s17
      %s20 = sphi 0, %s18
      %s21 = sphi 0, %s19
      %s22 = sphi 0, %s20
      %s34 = sphi 0, %s36
      %s37 = sphi 0, %s34
      %s38 = sphi 0, %s37
      %s54 = sphi 0, %s38
      %s58 = sphi 0, %s58
      %s60 = sphi 0, %s58
      %s61 = sphi 0, %s60
      %s75 = sphi 0, %s61
      %s79 = sphi 0, %s79
      %s81 = sphi 0, %s79
      %s82 = sphi 0, %s81
      %s96 = sphi 0, %s82
      %s104 = sphi 0, %s106
      %s107 = sphi 0, %s104
      %s108 = sphi 0, %s107
      %s124 = sphi 0, %s108
    $region4: #{qconv2d_lif_forward.1} parent=1 // loop_header_branch
      %13 = sbr.rel (%p11) target = $region8
    $region5: #{qconv2d_lif_forward.1} parent=1 // loop_body
      %s15 = ssub.s32 %s10, 1
      %s16 = ssub.s32 %s10, 2
      %s23 = sadd.s32 1, %s18
      %p24 = scmp.ge.s32.totalorder %s23, 8
      %s25 = scalar_select %p24, 0, %s23
      %s26 = sadd.s32 1, %s17
      %s27 = scalar_select %p24, %s26, %s17
      %p28 = scmp.ge.s32.totalorder %s27, 4
      %s29 = scalar_select %p28, 0, %s27
      %s30 = ssub.s32 %s18, %s25
      %s31 = ssub.s32 %s17, %s29
      %s32 = sor.u32 %s30, %s31
      %p33 = scmp.eq.s32.totalorder %s32, 0
      %s35 = sadd.s32 %s34, 1
      %s36 = scalar_select %p33, %s34, %s35
      %p39 = pneg %p33
      %p40 = scmp.eq.s32.totalorder %s10, 31
      %p41 = por %p39, %p40
      %p42 = scmp.ne.s32.totalorder %s34, %s37
      %p43 = scmp.eq.s32.totalorder %s10, 0
      %p44 = por %p42, %p43
      %p45 = scmp.ne.s32.totalorder %s34, %s37
      %p46 = scmp.eq.s32.totalorder %s15, 31
      %p47 = por %p45, %p46
      %p48 = scmp.ne.s32.totalorder %s37, %s38
      %p49 = scmp.eq.s32.totalorder %s15, 0
      %p50 = por %p48, %p49
      %p51 = scmp.ne.s32.totalorder %s37, %s38
      %p52 = scmp.eq.s32.totalorder %s16, 31
      %p53 = por %p51, %p52
      %p55 = scmp.ne.s32.totalorder %s38, %s54
      %p56 = scmp.eq.s32.totalorder %s16, 0
      %p57 = por %p55, %p56
      %s59 = sadd.s32 %s58, 1
      %p62 = scmp.eq.s32.totalorder %s10, 31
      %p63 = scmp.ne.s32.totalorder %s58, %s60
      %p64 = scmp.eq.s32.totalorder %s10, 0
      %p65 = por %p63, %p64
      %p66 = scmp.ne.s32.totalorder %s58, %s60
      %p67 = scmp.eq.s32.totalorder %s15, 31
      %p68 = por %p66, %p67
      %p69 = scmp.ne.s32.totalorder %s60, %s61
      %p70 = scmp.eq.s32.totalorder %s15, 0
      %p71 = por %p69, %p70
      %p72 = scmp.ne.s32.totalorder %s60, %s61
      %p73 = scmp.eq.s32.totalorder %s16, 31
      %p74 = por %p72, %p73
      %p76 = scmp.ne.s32.totalorder %s61, %s75
      %p77 = scmp.eq.s32.totalorder %s16, 0
      %p78 = por %p76, %p77
      %s80 = sadd.s32 %s79, 1
      %p83 = scmp.eq.s32.totalorder %s10, 31
      %p84 = scmp.ne.s32.totalorder %s79, %s81
      %p85 = scmp.eq.s32.totalorder %s10, 0
      %p86 = por %p84, %p85
      %p87 = scmp.ne.s32.totalorder %s79, %s81
      %p88 = scmp.eq.s32.totalorder %s15, 31
      %p89 = por %p87, %p88
      %p90 = scmp.ne.s32.totalorder %s81, %s82
      %p91 = scmp.eq.s32.totalorder %s15, 0
      %p92 = por %p90, %p91
      %p93 = scmp.ne.s32.totalorder %s81, %s82
      %p94 = scmp.eq.s32.totalorder %s16, 31
      %p95 = por %p93, %p94
      %p97 = scmp.ne.s32.totalorder %s82, %s96
      %p98 = scmp.eq.s32.totalorder %s16, 0
      %p99 = por %p97, %p98
      %s100 = ssub.s32 %s18, %s25
      %s101 = ssub.s32 %s17, %s29
      %s102 = sor.u32 %s100, %s101
      %p103 = scmp.eq.s32.totalorder %s102, 0
      %s105 = sadd.s32 %s104, 1
      %s106 = scalar_select %p103, %s104, %s105
      %p109 = pneg %p103
      %p110 = scmp.eq.s32.totalorder %s10, 31
      %p111 = por %p109, %p110
      %p112 = scmp.ne.s32.totalorder %s104, %s107
      %p113 = scmp.eq.s32.totalorder %s10, 0
      %p114 = por %p112, %p113
      %p115 = scmp.ne.s32.totalorder %s104, %s107
      %p116 = scmp.eq.s32.totalorder %s15, 31
      %p117 = por %p115, %p116
      %p118 = scmp.ne.s32.totalorder %s107, %s108
      %p119 = scmp.eq.s32.totalorder %s15, 0
      %p120 = por %p118, %p119
      %p121 = scmp.ne.s32.totalorder %s107, %s108
      %p122 = scmp.eq.s32.totalorder %s16, 31
      %p123 = por %p121, %p122
      %p125 = scmp.ne.s32.totalorder %s108, %s124
      %p126 = scmp.eq.s32.totalorder %s16, 0
      %p127 = por %p125, %p126
      %p128 = scmp.le.s32.totalorder 1, %s10
      %p129 = scmp.lt.s32.totalorder %s10, 33
      %p130 = pnand %p128, %p129
      %p131 = pneg %p130
      // Predicated region
      $region9: #{qconv2d_lif_forward.1} parent=5 // pred_check
        _
      $region10: #{qconv2d_lif_forward.1} parent=5 // pred_check_branch
        %133 = sbr.rel (%p130) target = $region12
      $region11: #{qconv2d_lif_forward.1} parent=5 // pred_region
        %s134 = ssub.s32 %s10, 1
        // Predicated region
        $region13: #{qconv2d_lif_forward.1} parent=11 // pred_check
          %p135 = pneg %p71
        $region14: #{qconv2d_lif_forward.1} parent=11 // pred_check_branch
          %137 = sbr.rel (%p135) target = $region16
        $region15: #{qconv2d_lif_forward.1} parent=11 // pred_region
          _
        $region16: #{qconv2d_lif_forward.1} parent=11 // pred_fallthru
          _
        // Predicated region
        $region17: #{qconv2d_lif_forward.1} parent=11 // pred_check
          %p138 = pneg %p92
        $region18: #{qconv2d_lif_forward.1} parent=11 // pred_check_branch
          %140 = sbr.rel (%p138) target = $region20
        $region19: #{qconv2d_lif_forward.1} parent=11 // pred_region
          %s142 = ssub.s32 16, 16
          %143 = vsyncadd [#allocation4], %s142
          %s145 = sshll.u32 %s2, 4
          %s146 = int_to_ptr.vmem [resolvable:$true] %s145
          %148 = dma.vmem_to_smem %s146, 16, [#allocation3], [#allocation4]
        $region20: #{qconv2d_lif_forward.1} parent=11 // pred_fallthru
          _
      $region12: #{qconv2d_lif_forward.1} parent=5 // pred_fallthru
        _
      %p149 = scmp.lt.s32.totalorder %s10, 32
      // Predicated region
      $region21: #{qconv2d_lif_forward.1} parent=5 // pred_check
        %p150 = pneg %p149
      $region22: #{qconv2d_lif_forward.1} parent=5 // pred_check_branch
        %152 = sbr.rel (%p150) target = $region24
      $region23: #{qconv2d_lif_forward.1} parent=5 // pred_region
        // Predicated region
        $region25: #{qconv2d_lif_forward.1} parent=23 // pred_check
          %p153 = pneg %p44
        $region26: #{qconv2d_lif_forward.1} parent=23 // pred_check_branch
          %155 = sbr.rel (%p153) target = $region28
        $region27: #{qconv2d_lif_forward.1} parent=23 // pred_region
          %p156 = scmp.lt.s32.totalorder %s18, 7
          %s157 = scalar_select %p156, %s18, 7
          %p158 = scmp.lt.s32.totalorder %s17, 3
          %s159 = scalar_select %p158, %s17, 3
          %s160 = smul.addr %s159, 3
          %s161 = smul.addr %s157, 12
          %s162 = sadd.s32 %s160, %s161
          %s163 = smul.addr %s162, 2
          %s164 = scalar_lea.vmem %s0, %s163
        $region28: #{qconv2d_lif_forward.1} parent=23 // pred_fallthru
          _
      $region24: #{qconv2d_lif_forward.1} parent=5 // pred_fallthru
        _
      %p165 = scmp.le.s32.totalorder 1, %s10
      %p166 = scmp.lt.s32.totalorder %s10, 33
      %p167 = pnand %p165, %p166
      %p168 = pneg %p167
      // Predicated region
      $region29: #{qconv2d_lif_forward.1} parent=5 // pred_check
        _
      $region30: #{qconv2d_lif_forward.1} parent=5 // pred_check_branch
        %170 = sbr.rel (%p167) target = $region32
      $region31: #{qconv2d_lif_forward.1} parent=5 // pred_region
        %s171 = ssub.s32 %s10, 1
        // Predicated region
        $region33: #{qconv2d_lif_forward.1} parent=31 // pred_check
          %p172 = pneg %p92
        $region34: #{qconv2d_lif_forward.1} parent=31 // pred_check_branch
          %174 = sbr.rel (%p172) target = $region36
        $region35: #{qconv2d_lif_forward.1} parent=31 // pred_region
          %175 = dma.done [#allocation4], 16
        $region36: #{qconv2d_lif_forward.1} parent=31 // pred_fallthru
          _
        %176 = sfence
        %p177 = scmp.lt.s32.totalorder %s20, 7
        %s178 = scalar_select %p177, %s20, 7
        %p179 = scmp.lt.s32.totalorder %s19, 3
        %s180 = scalar_select %p179, %s19, 3
        %s181 = smul.addr %s180, 3
        %s182 = smul.addr %s178, 12
        %s183 = sadd.s32 %s181, %s182
        %s184 = smul.addr %s183, 2
        %s185 = scalar_lea.vmem %s0, %s184
        %p186 = pneg %p50
        %p187 = pneg %p47
        %p188 = pneg %p71
        %p189 = pneg %p68
        %p190 = pneg %p92
        %p191 = pneg %p89
        %p192 = pneg %p120
        %p193 = pneg %p117
        %p194 = scmp.lt.s32.totalorder %s20, 7
        %s195 = scalar_select %p194, %s20, 7
        %p196 = scmp.lt.s32.totalorder %s19, 3
        %s197 = scalar_select %p196, %s19, 3
        %s198 = smul.addr %s197, 3
        %s199 = smul.addr %s195, 12
        %s200 = sadd.s32 %s198, %s199
        %s201 = smul.addr %s200, 4
        %s202 = scalar_lea.vmem %s3, %s201
        %p203 = scmp.lt.s32.totalorder %s20, 7
        %s204 = scalar_select %p203, %s20, 7
        %p205 = scmp.lt.s32.totalorder %s19, 3
        %s206 = scalar_select %p205, %s19, 3
        %s207 = smul.addr %s206, 3
        %s208 = smul.addr %s204, 12
        %s209 = sadd.s32 %s207, %s208
        %s210 = smul.addr %s209, 2
        %s211 = scalar_lea.vmem %s0, %s210
        %p212 = scmp.lt.s32.totalorder %s20, 7
        %s213 = scalar_select %p212, %s20, 7
        %p214 = scmp.lt.s32.totalorder %s19, 3
        %s215 = scalar_select %p214, %s19, 3
        %s216 = smul.addr %s215, 3
        %s217 = smul.addr %s213, 12
        %s218 = sadd.s32 %s216, %s217
        %s219 = smul.addr %s218, 4
        %s220 = scalar_lea.vmem %s3, %s219
        %s222 = sld [smem:[#allocation3]]
        %s223 = sld [smem:[#allocation3 + $0x1]]
        %s224 = sld [smem:[#allocation3 + $0x2]]
        %p225 = scmp.eq.s32.totalorder %s20, 0
        // Predicated region
        $region37: #{qconv2d_lif_forward.1} parent=31 // pred_check
          %p226 = pneg %p225
        $region38: #{qconv2d_lif_forward.1} parent=31 // pred_check_branch
          %228 = sbr.rel (%p226) target = $region40
        $region39: #{qconv2d_lif_forward.1} parent=31 // pred_region
          %229 = vst [vmem:[#allocation2] sm:$0xff] 0.0
          %230 = vst [vmem:[#allocation2 + $0x8] sm:$0xff] 0.0
          %vm231 = vcmask 261120
          %232 = vst.msk [vmem:[#allocation2 + $0x10] sm:$0xff] %vm231, 0.0
        $region40: #{qconv2d_lif_forward.1} parent=31 // pred_fallthru
          _
        %v233 = vld [vmem:[%s211] sm:$0x3f]
        %v234 = vld [vmem:[%s1] sm:$0xf]
        %s235 = scalar_lea.vmem %s1, 4
        %v236 = vld [vmem:[%s235] sm:$0xf]
        %v238 = vcombine.high %v233, %v233
        %v240 = vunpack.c.l.s4 1983009808
        %v241 = vunpack.c.0.s8 %v240
        %v242 = vlaneseq
        %v243 = vshrl.u32 %v242, 7
        %v244 = vsub.s32 %v241, %v243
        %v245 = vrot.slane %v233, %v244
        %v247 = vunpack.c.l.s4 1983009808
        %v248 = vunpack.c.0.s8 %v247
        %v249 = vlaneseq
        %v250 = vshrl.u32 %v249, 7
        %v251 = vsub.s32 %v248, %v250
        %v252 = vrot.slane %v238, %v251
        %v253 = vcombine.high %v245, %v245
        %254 = vrot.lane.b32.xlu0 %v245, 127
        %v255 = vpop.permute.xlu0 %254
        %256 = vrot.lane.b32.xlu0 %v253, 127
        %v257 = vpop.permute.xlu0 %256
        %258 = vrot.lane.b32.xlu0 %v252, 127
        %v259 = vpop.permute.xlu0 %258
        %vm260 = vcmask 1039360
        %v261 = vsel %vm260, %v255, %v257
        %v262 = vsel %vm260, %v257, %v259
        %vm263 = vcmask 31744
        %v265 = vsel %vm263, %v236, 0
        %vm267 = vcmask 1041408
        %v269 = vsel %vm267, %v261, 0
        %v272 = vsel %vm267, %v262, 0
        %v275 = vsel %vm267, %v259, 0
        %277 = vmatprep.subr.bf16.mxu0 %v272
        %278 = vmatpush1.bf16.msra.mxu0 %v269
        %279 = vmatprep.subr.bf16.mxu0 0
        %280 = vmatpush1.bf16.msra.mxu0 0
        %281 = vmatprep.subr.bf16.mxu0 0
        %282 = vmatpush1.bf16.msra.mxu0 0
        %283 = vmatprep.subr.bf16.mxu0 0
        %284 = vmatpush1.bf16.msra.mxu0 0
        %285 = vmatprep.subr.bf16.mxu0 0
        %286 = vmatpush1.bf16.msra.mxu0 0
        %287 = vmatprep.subr.bf16.mxu0 0
        %288 = vmatpush1.bf16.msra.mxu0 0
        %289 = vmatprep.subr.bf16.mxu0 0
        %290 = vmatpush1.bf16.msra.mxu0 0
        %291 = vmatprep.subr.bf16.mxu0 0
        %292 = vmatpush1.bf16.msra.mxu0 0
        %293 = vmatprep.subr.bf16.mxu0 0
        %294 = vmatpush1.bf16.msra.mxu0 0
        %295 = vmatprep.subr.bf16.mxu0 0
        %296 = vmatpush1.bf16.msra.mxu0 0
        %297 = vmatprep.subr.bf16.mxu0 0
        %298 = vmatpush1.bf16.msra.mxu0 0
        %299 = vmatprep.subr.bf16.mxu0 0
        %300 = vmatpush1.bf16.msra.mxu0 0
        %301 = vmatprep.subr.bf16.mxu0 0
        %302 = vmatpush1.bf16.msra.mxu0 0
        %303 = vmatprep.subr.bf16.mxu0 0
        %304 = vmatpush1.bf16.msra.mxu0 0
        %305 = vmatprep.subr.bf16.mxu0 0
        %306 = vmatpush1.bf16.msra.mxu0 0
        %307 = vmatprep.subr.bf16.mxu0 0
        %308 = vmatpush1.bf16.msra.mxu0 0
        %309 = vmatprep.mubr.bf16.mxu0 0
        %310 = vmatmul.mubr.bf16.gmra.mrb[0].mxu0 %v265
        %v311 = vpop.f32.mrb[0].mxu0
        %v312 = vadd.f32 0.0, %v311
        %v313 = vpop.f32.mrb[0].mxu0
        %v314 = vadd.f32 0.0, %v313
        %v315 = vpop.f32.mrb[0].mxu0
        %v316 = vpop.f32.mrb[0].mxu0
        %317 = vdwg.mxu0
        %318 = vmatprep.subr.bf16.mxu0 0
        %319 = vmatpush1.bf16.msra.mxu0 %v275
        %320 = vmatprep.subr.bf16.mxu0 0
        %321 = vmatpush1.bf16.msra.mxu0 0
        %322 = vmatprep.subr.bf16.mxu0 0
        %323 = vmatpush1.bf16.msra.mxu0 0
        %324 = vmatprep.subr.bf16.mxu0 0
        %325 = vmatpush1.bf16.msra.mxu0 0
        %326 = vmatprep.subr.bf16.mxu0 0
        %327 = vmatpush1.bf16.msra.mxu0 0
        %328 = vmatprep.subr.bf16.mxu0 0
        %329 = vmatpush1.bf16.msra.mxu0 0
        %330 = vmatprep.subr.bf16.mxu0 0
        %331 = vmatpush1.bf16.msra.mxu0 0
        %332 = vmatprep.subr.bf16.mxu0 0
        %333 = vmatpush1.bf16.msra.mxu0 0
        %334 = vmatprep.subr.bf16.mxu0 0
        %335 = vmatpush1.bf16.msra.mxu0 0
        %336 = vmatprep.subr.bf16.mxu0 0
        %337 = vmatpush1.bf16.msra.mxu0 0
        %338 = vmatprep.subr.bf16.mxu0 0
        %339 = vmatpush1.bf16.msra.mxu0 0
        %340 = vmatprep.subr.bf16.mxu0 0
        %341 = vmatpush1.bf16.msra.mxu0 0
        %342 = vmatprep.subr.bf16.mxu0 0
        %343 = vmatpush1.bf16.msra.mxu0 0
        %344 = vmatprep.subr.bf16.mxu0 0
        %345 = vmatpush1.bf16.msra.mxu0 0
        %346 = vmatprep.subr.bf16.mxu0 0
        %347 = vmatpush1.bf16.msra.mxu0 0
        %348 = vmatprep.subr.bf16.mxu0 0
        %349 = vmatpush1.bf16.msra.mxu0 0
        %350 = vmatprep.mubr.bf16.mxu0 0
        %351 = vmatmul.mubr.bf16.gmra.mrb[0].mxu0 %v265
        %v352 = vpop.f32.mrb[0].mxu0
        %v353 = vadd.f32 0.0, %v352
        %v354 = vpop.f32.mrb[0].mxu0
        %v355 = vpop.f32.mrb[0].mxu0
        %v356 = vpop.f32.mrb[0].mxu0
        %357 = vdwg.mxu0
        %v359 = vsel %vm263, %v234, 0
        %v362 = vsel %vm267, %v245, 0
        %v365 = vsel %vm267, %v253, 0
        %v368 = vsel %vm267, %v252, 0
        %370 = vmatprep.subr.bf16.mxu0 %v365
        %371 = vmatpush1.bf16.msra.mxu0 %v362
        %372 = vmatprep.subr.bf16.mxu0 0
        %373 = vmatpush1.bf16.msra.mxu0 0
        %374 = vmatprep.subr.bf16.mxu0 0
        %375 = vmatpush1.bf16.msra.mxu0 0
        %376 = vmatprep.subr.bf16.mxu0 0
        %377 = vmatpush1.bf16.msra.mxu0 0
        %378 = vmatprep.subr.bf16.mxu0 0
        %379 = vmatpush1.bf16.msra.mxu0 0
        %380 = vmatprep.subr.bf16.mxu0 0
        %381 = vmatpush1.bf16.msra.mxu0 0
        %382 = vmatprep.subr.bf16.mxu0 0
        %383 = vmatpush1.bf16.msra.mxu0 0
        %384 = vmatprep.subr.bf16.mxu0 0
        %385 = vmatpush1.bf16.msra.mxu0 0
        %386 = vmatprep.subr.bf16.mxu0 0
        %387 = vmatpush1.bf16.msra.mxu0 0
        %388 = vmatprep.subr.bf16.mxu0 0
        %389 = vmatpush1.bf16.msra.mxu0 0
        %390 = vmatprep.subr.bf16.mxu0 0
        %391 = vmatpush1.bf16.msra.mxu0 0
        %392 = vmatprep.subr.bf16.mxu0 0
        %393 = vmatpush1.bf16.msra.mxu0 0
        %394 = vmatprep.subr.bf16.mxu0 0
        %395 = vmatpush1.bf16.msra.mxu0 0
        %396 = vmatprep.subr.bf16.mxu0 0
        %397 = vmatpush1.bf16.msra.mxu0 0
        %398 = vmatprep.subr.bf16.mxu0 0
        %399 = vmatpush1.bf16.msra.mxu0 0
        %400 = vmatprep.subr.bf16.mxu0 0
        %401 = vmatpush1.bf16.msra.mxu0 0
        %402 = vmatprep.mubr.bf16.mxu0 0
        %403 = vmatmul.mubr.bf16.gmra.mrb[0].mxu0 %v359
        %v404 = vpop.f32.mrb[0].mxu0
        %v405 = vadd.f32 %v312, %v404
        %v406 = vpop.f32.mrb[0].mxu0
        %v407 = vadd.f32 %v314, %v406
        %v408 = vpop.f32.mrb[0].mxu0
        %v409 = vpop.f32.mrb[0].mxu0
        %410 = vdwg.mxu0
        %411 = vmatprep.subr.bf16.mxu0 0
        %412 = vmatpush1.bf16.msra.mxu0 %v368
        %413 = vmatprep.subr.bf16.mxu0 0
        %414 = vmatpush1.bf16.msra.mxu0 0
        %415 = vmatprep.subr.bf16.mxu0 0
        %416 = vmatpush1.bf16.msra.mxu0 0
        %417 = vmatprep.subr.bf16.mxu0 0
        %418 = vmatpush1.bf16.msra.mxu0 0
        %419 = vmatprep.subr.bf16.mxu0 0
        %420 = vmatpush1.bf16.msra.mxu0 0
        %421 = vmatprep.subr.bf16.mxu0 0
        %422 = vmatpush1.bf16.msra.mxu0 0
        %423 = vmatprep.subr.bf16.mxu0 0
        %424 = vmatpush1.bf16.msra.mxu0 0
        %425 = vmatprep.subr.bf16.mxu0 0
        %426 = vmatpush1.bf16.msra.mxu0 0
        %427 = vmatprep.subr.bf16.mxu0 0
        %428 = vmatpush1.bf16.msra.mxu0 0
        %429 = vmatprep.subr.bf16.mxu0 0
        %430 = vmatpush1.bf16.msra.mxu0 0
        %431 = vmatprep.subr.bf16.mxu0 0
        %432 = vmatpush1.bf16.msra.mxu0 0
        %433 = vmatprep.subr.bf16.mxu0 0
        %434 = vmatpush1.bf16.msra.mxu0 0
        %435 = vmatprep.subr.bf16.mxu0 0
        %436 = vmatpush1.bf16.msra.mxu0 0
        %437 = vmatprep.subr.bf16.mxu0 0
        %438 = vmatpush1.bf16.msra.mxu0 0
        %439 = vmatprep.subr.bf16.mxu0 0
        %440 = vmatpush1.bf16.msra.mxu0 0
        %441 = vmatprep.subr.bf16.mxu0 0
        %442 = vmatpush1.bf16.msra.mxu0 0
        %443 = vmatprep.mubr.bf16.mxu0 0
        %444 = vmatmul.mubr.bf16.gmra.mrb[0].mxu0 %v359
        %v445 = vpop.f32.mrb[0].mxu0
        %v446 = vadd.f32 %v353, %v445
        %v447 = vpop.f32.mrb[0].mxu0
        %v448 = vpop.f32.mrb[0].mxu0
        %v449 = vpop.f32.mrb[0].mxu0
        %450 = vdwg.mxu0
        %s451 = scalar_lea.vmem %s1, 8
        %v452 = vld [vmem:[%s451] sm:$0xf]
        %453 = vrot.lane.b32.xlu0 %v245, 126
        %v454 = vpop.permute.xlu0 %453
        %455 = vrot.lane.b32.xlu0 %v253, 126
        %v456 = vpop.permute.xlu0 %455
        %457 = vrot.lane.b32.xlu0 %v252, 126
        %v458 = vpop.permute.xlu0 %457
        %vm459 = vcmask 1031168
        %v460 = vsel %vm459, %v454, %v456
        %v461 = vsel %vm459, %v456, %v458
        %v463 = vsel %vm263, %v452, 0
        %v466 = vsel %vm267, %v460, 0
        %v469 = vsel %vm267, %v461, 0
        %v472 = vsel %vm267, %v458, 0
        %474 = vmatprep.subr.bf16.mxu0 %v469
        %475 = vmatpush1.bf16.msra.mxu0 %v466
        %476 = vmatprep.subr.bf16.mxu0 0
        %477 = vmatpush1.bf16.msra.mxu0 0
        %478 = vmatprep.subr.bf16.mxu0 0
        %479 = vmatpush1.bf16.msra.mxu0 0
        %480 = vmatprep.subr.bf16.mxu0 0
        %481 = vmatpush1.bf16.msra.mxu0 0
        %482 = vmatprep.subr.bf16.mxu0 0
        %483 = vmatpush1.bf16.msra.mxu0 0
        %484 = vmatprep.subr.bf16.mxu0 0
        %485 = vmatpush1.bf16.msra.mxu0 0
        %486 = vmatprep.subr.bf16.mxu0 0
        %487 = vmatpush1.bf16.msra.mxu0 0
        %488 = vmatprep.subr.bf16.mxu0 0
        %489 = vmatpush1.bf16.msra.mxu0 0
        %490 = vmatprep.subr.bf16.mxu0 0
        %491 = vmatpush1.bf16.msra.mxu0 0
        %492 = vmatprep.subr.bf16.mxu0 0
        %493 = vmatpush1.bf16.msra.mxu0 0
        %494 = vmatprep.subr.bf16.mxu0 0
        %495 = vmatpush1.bf16.msra.mxu0 0
        %496 = vmatprep.subr.bf16.mxu0 0
        %497 = vmatpush1.bf16.msra.mxu0 0
        %498 = vmatprep.subr.bf16.mxu0 0
        %499 = vmatpush1.bf16.msra.mxu0 0
        %500 = vmatprep.subr.bf16.mxu0 0
        %501 = vmatpush1.bf16.msra.mxu0 0
        %502 = vmatprep.subr.bf16.mxu0 0
        %503 = vmatpush1.bf16.msra.mxu0 0
        %504 = vmatprep.subr.bf16.mxu0 0
        %505 = vmatpush1.bf16.msra.mxu0 0
        %506 = vmatprep.mubr.bf16.mxu0 0
        %507 = vmatmul.mubr.bf16.gmra.mrb[0].mxu0 %v463
        %v508 = vpop.f32.mrb[0].mxu0
        %v509 = vadd.f32 0.0, %v508
        %v510 = vpop.f32.mrb[0].mxu0
        %v511 = vadd.f32 0.0, %v510
        %v512 = vpop.f32.mrb[0].mxu0
        %v513 = vpop.f32.mrb[0].mxu0
        %514 = vdwg.mxu0
        %515 = vmatprep.subr.bf16.mxu0 0
        %516 = vmatpush1.bf16.msra.mxu0 %v472
        %517 = vmatprep.subr.bf16.mxu0 0
        %518 = vmatpush1.bf16.msra.mxu0 0
        %519 = vmatprep.subr.bf16.mxu0 0
        %520 = vmatpush1.bf16.msra.mxu0 0
        %521 = vmatprep.subr.bf16.mxu0 0
        %522 = vmatpush1.bf16.msra.mxu0 0
        %523 = vmatprep.subr.bf16.mxu0 0
        %524 = vmatpush1.bf16.msra.mxu0 0
        %525 = vmatprep.subr.bf16.mxu0 0
        %526 = vmatpush1.bf16.msra.mxu0 0
        %527 = vmatprep.subr.bf16.mxu0 0
        %528 = vmatpush1.bf16.msra.mxu0 0
        %529 = vmatprep.subr.bf16.mxu0 0
        %530 = vmatpush1.bf16.msra.mxu0 0
        %531 = vmatprep.subr.bf16.mxu0 0
        %532 = vmatpush1.bf16.msra.mxu0 0
        %533 = vmatprep.subr.bf16.mxu0 0
        %534 = vmatpush1.bf16.msra.mxu0 0
        %535 = vmatprep.subr.bf16.mxu0 0
        %536 = vmatpush1.bf16.msra.mxu0 0
        %537 = vmatprep.subr.bf16.mxu0 0
        %538 = vmatpush1.bf16.msra.mxu0 0
        %539 = vmatprep.subr.bf16.mxu0 0
        %540 = vmatpush1.bf16.msra.mxu0 0
        %541 = vmatprep.subr.bf16.mxu0 0
        %542 = vmatpush1.bf16.msra.mxu0 0
        %543 = vmatprep.subr.bf16.mxu0 0
        %544 = vmatpush1.bf16.msra.mxu0 0
        %545 = vmatprep.subr.bf16.mxu0 0
        %546 = vmatpush1.bf16.msra.mxu0 0
        %547 = vmatprep.mubr.bf16.mxu0 0
        %548 = vmatmul.mubr.bf16.gmra.mrb[0].mxu0 %v463
        %v549 = vpop.f32.mrb[0].mxu0
        %v550 = vadd.f32 0.0, %v549
        %v551 = vpop.f32.mrb[0].mxu0
        %v552 = vpop.f32.mrb[0].mxu0
        %v553 = vpop.f32.mrb[0].mxu0
        %554 = vdwg.mxu0
        %v555 = vadd.f32 %v405, %v509
        %v556 = vadd.f32 %v407, %v511
        %v557 = vadd.f32 %v446, %v550
        %s558 = scalar_lea.vmem %s1, 12
        %v559 = vld [vmem:[%s558] sm:$0xf]
        %560 = vrot.lane.b32.xlu0 %v245, 110
        %v561 = vpop.permute.xlu0 %560
        %562 = vrot.lane.b32.xlu0 %v253, 110
        %v563 = vpop.permute.xlu0 %562
        %564 = vrot.lane.b32.xlu0 %v252, 110
        %v565 = vpop.permute.xlu0 %564
        %vm566 = vcmask 900096
        %v567 = vsel %vm566, %v561, %v563
        %v568 = vsel %vm566, %v563, %v565
        %v570 = vsel %vm263, %v559, 0
        %v573 = vsel %vm267, %v567, 0
        %v576 = vsel %vm267, %v568, 0
        %v579 = vsel %vm267, %v565, 0
        %581 = vmatprep.subr.bf16.mxu0 %v576
        %582 = vmatpush1.bf16.msra.mxu0 %v573
        %583 = vmatprep.subr.bf16.mxu0 0
        %584 = vmatpush1.bf16.msra.mxu0 0
        %585 = vmatprep.subr.bf16.mxu0 0
        %586 = vmatpush1.bf16.msra.mxu0 0
        %587 = vmatprep.subr.bf16.mxu0 0
        %588 = vmatpush1.bf16.msra.mxu0 0
        %589 = vmatprep.subr.bf16.mxu0 0
        %590 = vmatpush1.bf16.msra.mxu0 0
        %591 = vmatprep.subr.bf16.mxu0 0
        %592 = vmatpush1.bf16.msra.mxu0 0
        %593 = vmatprep.subr.bf16.mxu0 0
        %594 = vmatpush1.bf16.msra.mxu0 0
        %595 = vmatprep.subr.bf16.mxu0 0
        %596 = vmatpush1.bf16.msra.mxu0 0
        %597 = vmatprep.subr.bf16.mxu0 0
        %598 = vmatpush1.bf16.msra.mxu0 0
        %599 = vmatprep.subr.bf16.mxu0 0
        %600 = vmatpush1.bf16.msra.mxu0 0
        %601 = vmatprep.subr.bf16.mxu0 0
        %602 = vmatpush1.bf16.msra.mxu0 0
        %603 = vmatprep.subr.bf16.mxu0 0
        %604 = vmatpush1.bf16.msra.mxu0 0
        %605 = vmatprep.subr.bf16.mxu0 0
        %606 = vmatpush1.bf16.msra.mxu0 0
        %607 = vmatprep.subr.bf16.mxu0 0
        %608 = vmatpush1.bf16.msra.mxu0 0
        %609 = vmatprep.subr.bf16.mxu0 0
        %610 = vmatpush1.bf16.msra.mxu0 0
        %611 = vmatprep.subr.bf16.mxu0 0
        %612 = vmatpush1.bf16.msra.mxu0 0
        %613 = vmatprep.mubr.bf16.mxu0 0
        %614 = vmatmul.mubr.bf16.gmra.mrb[0].mxu0 %v570
        %v615 = vpop.f32.mrb[0].mxu0
        %v616 = vadd.f32 0.0, %v615
        %v617 = vpop.f32.mrb[0].mxu0
        %v618 = vadd.f32 0.0, %v617
        %v619 = vpop.f32.mrb[0].mxu0
        %v620 = vpop.f32.mrb[0].mxu0
        %621 = vdwg.mxu0
        %622 = vmatprep.subr.bf16.mxu0 0
        %623 = vmatpush1.bf16.msra.mxu0 %v579
        %624 = vmatprep.subr.bf16.mxu0 0
        %625 = vmatpush1.bf16.msra.mxu0 0
        %626 = vmatprep.subr.bf16.mxu0 0
        %627 = vmatpush1.bf16.msra.mxu0 0
        %628 = vmatprep.subr.bf16.mxu0 0
        %629 = vmatpush1.bf16.msra.mxu0 0
        %630 = vmatprep.subr.bf16.mxu0 0
        %631 = vmatpush1.bf16.msra.mxu0 0
        %632 = vmatprep.subr.bf16.mxu0 0
        %633 = vmatpush1.bf16.msra.mxu0 0
        %634 = vmatprep.subr.bf16.mxu0 0
        %635 = vmatpush1.bf16.msra.mxu0 0
        %636 = vmatprep.subr.bf16.mxu0 0
        %637 = vmatpush1.bf16.msra.mxu0 0
        %638 = vmatprep.subr.bf16.mxu0 0
        %639 = vmatpush1.bf16.msra.mxu0 0
        %640 = vmatprep.subr.bf16.mxu0 0
        %641 = vmatpush1.bf16.msra.mxu0 0
        %642 = vmatprep.subr.bf16.mxu0 0
        %643 = vmatpush1.bf16.msra.mxu0 0
        %644 = vmatprep.subr.bf16.mxu0 0
        %645 = vmatpush1.bf16.msra.mxu0 0
        %646 = vmatprep.subr.bf16.mxu0 0
        %647 = vmatpush1.bf16.msra.mxu0 0
        %648 = vmatprep.subr.bf16.mxu0 0
        %649 = vmatpush1.bf16.msra.mxu0 0
        %650 = vmatprep.subr.bf16.mxu0 0
        %651 = vmatpush1.bf16.msra.mxu0 0
        %652 = vmatprep.subr.bf16.mxu0 0
        %653 = vmatpush1.bf16.msra.mxu0 0
        %654 = vmatprep.mubr.bf16.mxu0 0
        %655 = vmatmul.mubr.bf16.gmra.mrb[0].mxu0 %v570
        %v656 = vpop.f32.mrb[0].mxu0
        %v657 = vadd.f32 0.0, %v656
        %v658 = vpop.f32.mrb[0].mxu0
        %v659 = vpop.f32.mrb[0].mxu0
        %v660 = vpop.f32.mrb[0].mxu0
        %661 = vdwg.mxu0
        %v662 = vadd.f32 %v555, %v616
        %v663 = vadd.f32 %v556, %v618
        %v664 = vadd.f32 %v557, %v657
        %s665 = scalar_lea.vmem %s1, 16
        %v666 = vld [vmem:[%s665] sm:$0xf]
        %667 = vrot.lane.b32.xlu0 %v245, 109
        %v668 = vpop.permute.xlu0 %667
        %669 = vrot.lane.b32.xlu0 %v253, 109
        %v670 = vpop.permute.xlu0 %669
        %671 = vrot.lane.b32.xlu0 %v252, 109
        %v672 = vpop.permute.xlu0 %671
        %vm673 = vcmask 891904
        %v674 = vsel %vm673, %v668, %v670
        %v675 = vsel %vm673, %v670, %v672
        %v677 = vsel %vm263, %v666, 0
        %v680 = vsel %vm267, %v674, 0
        %v683 = vsel %vm267, %v675, 0
        %v686 = vsel %vm267, %v672, 0
        %688 = vmatprep.subr.bf16.mxu0 %v683
        %689 = vmatpush1.bf16.msra.mxu0 %v680
        %690 = vmatprep.subr.bf16.mxu0 0
        %691 = vmatpush1.bf16.msra.mxu0 0
        %692 = vmatprep.subr.bf16.mxu0 0
        %693 = vmatpush1.bf16.msra.mxu0 0
        %694 = vmatprep.subr.bf16.mxu0 0
        %695 = vmatpush1.bf16.msra.mxu0 0
        %696 = vmatprep.subr.bf16.mxu0 0
        %697 = vmatpush1.bf16.msra.mxu0 0
        %698 = vmatprep.subr.bf16.mxu0 0
        %699 = vmatpush1.bf16.msra.mxu0 0
        %700 = vmatprep.subr.bf16.mxu0 0
        %701 = vmatpush1.bf16.msra.mxu0 0
        %702 = vmatprep.subr.bf16.mxu0 0
        %703 = vmatpush1.bf16.msra.mxu0 0
        %704 = vmatprep.subr.bf16.mxu0 0
        %705 = vmatpush1.bf16.msra.mxu0 0
        %706 = vmatprep.subr.bf16.mxu0 0
        %707 = vmatpush1.bf16.msra.mxu0 0
        %708 = vmatprep.subr.bf16.mxu0 0
        %709 = vmatpush1.bf16.msra.mxu0 0
        %710 = vmatprep.subr.bf16.mxu0 0
        %711 = vmatpush1.bf16.msra.mxu0 0
        %712 = vmatprep.subr.bf16.mxu0 0
        %713 = vmatpush1.bf16.msra.mxu0 0
        %714 = vmatprep.subr.bf16.mxu0 0
        %715 = vmatpush1.bf16.msra.mxu0 0
        %716 = vmatprep.subr.bf16.mxu0 0
        %717 = vmatpush1.bf16.msra.mxu0 0
        %718 = vmatprep.subr.bf16.mxu0 0
        %719 = vmatpush1.bf16.msra.mxu0 0
        %720 = vmatprep.mubr.bf16.mxu0 0
        %721 = vmatmul.mubr.bf16.gmra.mrb[0].mxu0 %v677
        %v722 = vpop.f32.mrb[0].mxu0
        %v723 = vadd.f32 0.0, %v722
        %v724 = vpop.f32.mrb[0].mxu0
        %v725 = vadd.f32 0.0, %v724
        %v726 = vpop.f32.mrb[0].mxu0
        %v727 = vpop.f32.mrb[0].mxu0
        %728 = vdwg.mxu0
        %729 = vmatprep.subr.bf16.mxu0 0
        %730 = vmatpush1.bf16.msra.mxu0 %v686
        %731 = vmatprep.subr.bf16.mxu0 0
        %732 = vmatpush1.bf16.msra.mxu0 0
        %733 = vmatprep.subr.bf16.mxu0 0
        %734 = vmatpush1.bf16.msra.mxu0 0
        %735 = vmatprep.subr.bf16.mxu0 0
        %736 = vmatpush1.bf16.msra.mxu0 0
        %737 = vmatprep.subr.bf16.mxu0 0
        %738 = vmatpush1.bf16.msra.mxu0 0
        %739 = vmatprep.subr.bf16.mxu0 0
        %740 = vmatpush1.bf16.msra.mxu0 0
        %741 = vmatprep.subr.bf16.mxu0 0
        %742 = vmatpush1.bf16.msra.mxu0 0
        %743 = vmatprep.subr.bf16.mxu0 0
        %744 = vmatpush1.bf16.msra.mxu0 0
        %745 = vmatprep.subr.bf16.mxu0 0
        %746 = vmatpush1.bf16.msra.mxu0 0
        %747 = vmatprep.subr.bf16.mxu0 0
        %748 = vmatpush1.bf16.msra.mxu0 0
        %749 = vmatprep.subr.bf16.mxu0 0
        %750 = vmatpush1.bf16.msra.mxu0 0
        %751 = vmatprep.subr.bf16.mxu0 0
        %752 = vmatpush1.bf16.msra.mxu0 0
        %753 = vmatprep.subr.bf16.mxu0 0
        %754 = vmatpush1.bf16.msra.mxu0 0
        %755 = vmatprep.subr.bf16.mxu0 0
        %756 = vmatpush1.bf16.msra.mxu0 0
        %757 = vmatprep.subr.bf16.mxu0 0
        %758 = vmatpush1.bf16.msra.mxu0 0
        %759 = vmatprep.subr.bf16.mxu0 0
        %760 = vmatpush1.bf16.msra.mxu0 0
        %761 = vmatprep.mubr.bf16.mxu0 0
        %762 = vmatmul.mubr.bf16.gmra.mrb[0].mxu0 %v677
        %v763 = vpop.f32.mrb[0].mxu0
        %v764 = vadd.f32 0.0, %v763
        %v765 = vpop.f32.mrb[0].mxu0
        %v766 = vpop.f32.mrb[0].mxu0
        %v767 = vpop.f32.mrb[0].mxu0
        %768 = vdwg.mxu0
        %v769 = vadd.f32 %v662, %v723
        %v770 = vadd.f32 %v663, %v725
        %v771 = vadd.f32 %v664, %v764
        %s772 = scalar_lea.vmem %s1, 20
        %v773 = vld [vmem:[%s772] sm:$0xf]
        %774 = vrot.lane.b32.xlu0 %v245, 108
        %v775 = vpop.permute.xlu0 %774
        %776 = vrot.lane.b32.xlu0 %v253, 108
        %v777 = vpop.permute.xlu0 %776
        %778 = vrot.lane.b32.xlu0 %v252, 108
        %v779 = vpop.permute.xlu0 %778
        %vm780 = vcmask 883712
        %v781 = vsel %vm780, %v775, %v777
        %v782 = vsel %vm780, %v777, %v779
        %v784 = vsel %vm263, %v773, 0
        %v787 = vsel %vm267, %v781, 0
        %v790 = vsel %vm267, %v782, 0
        %v793 = vsel %vm267, %v779, 0
        %795 = vmatprep.subr.bf16.mxu0 %v790
        %796 = vmatpush1.bf16.msra.mxu0 %v787
        %797 = vmatprep.subr.bf16.mxu0 0
        %798 = vmatpush1.bf16.msra.mxu0 0
        %799 = vmatprep.subr.bf16.mxu0 0
        %800 = vmatpush1.bf16.msra.mxu0 0
        %801 = vmatprep.subr.bf16.mxu0 0
        %802 = vmatpush1.bf16.msra.mxu0 0
        %803 = vmatprep.subr.bf16.mxu0 0
        %804 = vmatpush1.bf16.msra.mxu0 0
        %805 = vmatprep.subr.bf16.mxu0 0
        %806 = vmatpush1.bf16.msra.mxu0 0
        %807 = vmatprep.subr.bf16.mxu0 0
        %808 = vmatpush1.bf16.msra.mxu0 0
        %809 = vmatprep.subr.bf16.mxu0 0
        %810 = vmatpush1.bf16.msra.mxu0 0
        %811 = vmatprep.subr.bf16.mxu0 0
        %812 = vmatpush1.bf16.msra.mxu0 0
        %813 = vmatprep.subr.bf16.mxu0 0
        %814 = vmatpush1.bf16.msra.mxu0 0
        %815 = vmatprep.subr.bf16.mxu0 0
        %816 = vmatpush1.bf16.msra.mxu0 0
        %817 = vmatprep.subr.bf16.mxu0 0
        %818 = vmatpush1.bf16.msra.mxu0 0
        %819 = vmatprep.subr.bf16.mxu0 0
        %820 = vmatpush1.bf16.msra.mxu0 0
        %821 = vmatprep.subr.bf16.mxu0 0
        %822 = vmatpush1.bf16.msra.mxu0 0
        %823 = vmatprep.subr.bf16.mxu0 0
        %824 = vmatpush1.bf16.msra.mxu0 0
        %825 = vmatprep.subr.bf16.mxu0 0
        %826 = vmatpush1.bf16.msra.mxu0 0
        %827 = vmatprep.mubr.bf16.mxu0 0
        %828 = vmatmul.mubr.bf16.gmra.mrb[0].mxu0 %v784
        %v829 = vpop.f32.mrb[0].mxu0
        %v830 = vadd.f32 0.0, %v829
        %v831 = vpop.f32.mrb[0].mxu0
        %v832 = vadd.f32 0.0, %v831
        %v833 = vpop.f32.mrb[0].mxu0
        %v834 = vpop.f32.mrb[0].mxu0
        %835 = vdwg.mxu0
        %836 = vmatprep.subr.bf16.mxu0 0
        %837 = vmatpush1.bf16.msra.mxu0 %v793
        %838 = vmatprep.subr.bf16.mxu0 0
        %839 = vmatpush1.bf16.msra.mxu0 0
        %840 = vmatprep.subr.bf16.mxu0 0
        %841 = vmatpush1.bf16.msra.mxu0 0
        %842 = vmatprep.subr.bf16.mxu0 0
        %843 = vmatpush1.bf16.msra.mxu0 0
        %844 = vmatprep.subr.bf16.mxu0 0
        %845 = vmatpush1.bf16.msra.mxu0 0
        %846 = vmatprep.subr.bf16.mxu0 0
        %847 = vmatpush1.bf16.msra.mxu0 0
        %848 = vmatprep.subr.bf16.mxu0 0
        %849 = vmatpush1.bf16.msra.mxu0 0
        %850 = vmatprep.subr.bf16.mxu0 0
        %851 = vmatpush1.bf16.msra.mxu0 0
        %852 = vmatprep.subr.bf16.mxu0 0
        %853 = vmatpush1.bf16.msra.mxu0 0
        %854 = vmatprep.subr.bf16.mxu0 0
        %855 = vmatpush1.bf16.msra.mxu0 0
        %856 = vmatprep.subr.bf16.mxu0 0
        %857 = vmatpush1.bf16.msra.mxu0 0
        %858 = vmatprep.subr.bf16.mxu0 0
        %859 = vmatpush1.bf16.msra.mxu0 0
        %860 = vmatprep.subr.bf16.mxu0 0
        %861 = vmatpush1.bf16.msra.mxu0 0
        %862 = vmatprep.subr.bf16.mxu0 0
        %863 = vmatpush1.bf16.msra.mxu0 0
        %864 = vmatprep.subr.bf16.mxu0 0
        %865 = vmatpush1.bf16.msra.mxu0 0
        %866 = vmatprep.subr.bf16.mxu0 0
        %867 = vmatpush1.bf16.msra.mxu0 0
        %868 = vmatprep.mubr.bf16.mxu0 0
        %869 = vmatmul.mubr.bf16.gmra.mrb[0].mxu0 %v784
        %v870 = vpop.f32.mrb[0].mxu0
        %v871 = vadd.f32 0.0, %v870
        %v872 = vpop.f32.mrb[0].mxu0
        %v873 = vpop.f32.mrb[0].mxu0
        %v874 = vpop.f32.mrb[0].mxu0
        %875 = vdwg.mxu0
        %v876 = vadd.f32 %v769, %v830
        %v877 = vadd.f32 %v770, %v832
        %v878 = vadd.f32 %v771, %v871
        %s879 = scalar_lea.vmem %s1, 24
        %v880 = vld [vmem:[%s879] sm:$0xf]
        %881 = vrot.lane.b32.xlu0 %v245, 92
        %v882 = vpop.permute.xlu0 %881
        %883 = vrot.lane.b32.xlu0 %v253, 92
        %v884 = vpop.permute.xlu0 %883
        %885 = vrot.lane.b32.xlu0 %v252, 92
        %v886 = vpop.permute.xlu0 %885
        %vm887 = vcmask 752640
        %v888 = vsel %vm887, %v882, %v884
        %v889 = vsel %vm887, %v884, %v886
        %v891 = vsel %vm263, %v880, 0
        %v894 = vsel %vm267, %v888, 0
        %v897 = vsel %vm267, %v889, 0
        %v900 = vsel %vm267, %v886, 0
        %902 = vmatprep.subr.bf16.mxu0 %v897
        %903 = vmatpush1.bf16.msra.mxu0 %v894
        %904 = vmatprep.subr.bf16.mxu0 0
        %905 = vmatpush1.bf16.msra.mxu0 0
        %906 = vmatprep.subr.bf16.mxu0 0
        %907 = vmatpush1.bf16.msra.mxu0 0
        %908 = vmatprep.subr.bf16.mxu0 0
        %909 = vmatpush1.bf16.msra.mxu0 0
        %910 = vmatprep.subr.bf16.mxu0 0
        %911 = vmatpush1.bf16.msra.mxu0 0
        %912 = vmatprep.subr.bf16.mxu0 0
        %913 = vmatpush1.bf16.msra.mxu0 0
        %914 = vmatprep.subr.bf16.mxu0 0
        %915 = vmatpush1.bf16.msra.mxu0 0
        %916 = vmatprep.subr.bf16.mxu0 0
        %917 = vmatpush1.bf16.msra.mxu0 0
        %918 = vmatprep.subr.bf16.mxu0 0
        %919 = vmatpush1.bf16.msra.mxu0 0
        %920 = vmatprep.subr.bf16.mxu0 0
        %921 = vmatpush1.bf16.msra.mxu0 0
        %922 = vmatprep.subr.bf16.mxu0 0
        %923 = vmatpush1.bf16.msra.mxu0 0
        %924 = vmatprep.subr.bf16.mxu0 0
        %925 = vmatpush1.bf16.msra.mxu0 0
        %926 = vmatprep.subr.bf16.mxu0 0
        %927 = vmatpush1.bf16.msra.mxu0 0
        %928 = vmatprep.subr.bf16.mxu0 0
        %929 = vmatpush1.bf16.msra.mxu0 0
        %930 = vmatprep.subr.bf16.mxu0 0
        %931 = vmatpush1.bf16.msra.mxu0 0
        %932 = vmatprep.subr.bf16.mxu0 0
        %933 = vmatpush1.bf16.msra.mxu0 0
        %934 = vmatprep.mubr.bf16.mxu0 0
        %935 = vmatmul.mubr.bf16.gmra.mrb[0].mxu0 %v891
        %v936 = vpop.f32.mrb[0].mxu0
        %v937 = vadd.f32 0.0, %v936
        %v938 = vpop.f32.mrb[0].mxu0
        %v939 = vadd.f32 0.0, %v938
        %v940 = vpop.f32.mrb[0].mxu0
        %v941 = vpop.f32.mrb[0].mxu0
        %942 = vdwg.mxu0
        %943 = vmatprep.subr.bf16.mxu0 0
        %944 = vmatpush1.bf16.msra.mxu0 %v900
        %945 = vmatprep.subr.bf16.mxu0 0
        %946 = vmatpush1.bf16.msra.mxu0 0
        %947 = vmatprep.subr.bf16.mxu0 0
        %948 = vmatpush1.bf16.msra.mxu0 0
        %949 = vmatprep.subr.bf16.mxu0 0
        %950 = vmatpush1.bf16.msra.mxu0 0
        %951 = vmatprep.subr.bf16.mxu0 0
        %952 = vmatpush1.bf16.msra.mxu0 0
        %953 = vmatprep.subr.bf16.mxu0 0
        %954 = vmatpush1.bf16.msra.mxu0 0
        %955 = vmatprep.subr.bf16.mxu0 0
        %956 = vmatpush1.bf16.msra.mxu0 0
        %957 = vmatprep.subr.bf16.mxu0 0
        %958 = vmatpush1.bf16.msra.mxu0 0
        %959 = vmatprep.subr.bf16.mxu0 0
        %960 = vmatpush1.bf16.msra.mxu0 0
        %961 = vmatprep.subr.bf16.mxu0 0
        %962 = vmatpush1.bf16.msra.mxu0 0
        %963 = vmatprep.subr.bf16.mxu0 0
        %964 = vmatpush1.bf16.msra.mxu0 0
        %965 = vmatprep.subr.bf16.mxu0 0
        %966 = vmatpush1.bf16.msra.mxu0 0
        %967 = vmatprep.subr.bf16.mxu0 0
        %968 = vmatpush1.bf16.msra.mxu0 0
        %969 = vmatprep.subr.bf16.mxu0 0
        %970 = vmatpush1.bf16.msra.mxu0 0
        %971 = vmatprep.subr.bf16.mxu0 0
        %972 = vmatpush1.bf16.msra.mxu0 0
        %973 = vmatprep.subr.bf16.mxu0 0
        %974 = vmatpush1.bf16.msra.mxu0 0
        %975 = vmatprep.mubr.bf16.mxu0 0
        %976 = vmatmul.mubr.bf16.gmra.mrb[0].mxu0 %v891
        %v977 = vpop.f32.mrb[0].mxu0
        %v978 = vadd.f32 0.0, %v977
        %v979 = vpop.f32.mrb[0].mxu0
        %v980 = vpop.f32.mrb[0].mxu0
        %v981 = vpop.f32.mrb[0].mxu0
        %982 = vdwg.mxu0
        %v983 = vadd.f32 %v876, %v937
        %v984 = vadd.f32 %v877, %v939
        %v985 = vadd.f32 %v878, %v978
        %s986 = scalar_lea.vmem %s1, 28
        %v987 = vld [vmem:[%s986] sm:$0xf]
        %988 = vrot.lane.b32.xlu0 %v245, 91
        %v989 = vpop.permute.xlu0 %988
        %990 = vrot.lane.b32.xlu0 %v253, 91
        %v991 = vpop.permute.xlu0 %990
        %992 = vrot.lane.b32.xlu0 %v252, 91
        %v993 = vpop.permute.xlu0 %992
        %vm994 = vcmask 744448
        %v995 = vsel %vm994, %v989, %v991
        %v996 = vsel %vm994, %v991, %v993
        %v998 = vsel %vm263, %v987, 0
        %v1001 = vsel %vm267, %v995, 0
        %v1004 = vsel %vm267, %v996, 0
        %v1007 = vsel %vm267, %v993, 0
        %1009 = vmatprep.subr.bf16.mxu0 %v1004
        %1010 = vmatpush1.bf16.msra.mxu0 %v1001
        %1011 = vmatprep.subr.bf16.mxu0 0
        %1012 = vmatpush1.bf16.msra.mxu0 0
        %1013 = vmatprep.subr.bf16.mxu0 0
        %1014 = vmatpush1.bf16.msra.mxu0 0
        %1015 = vmatprep.subr.bf16.mxu0 0
        %1016 = vmatpush1.bf16.msra.mxu0 0
        %1017 = vmatprep.subr.bf16.mxu0 0
        %1018 = vmatpush1.bf16.msra.mxu0 0
        %1019 = vmatprep.subr.bf16.mxu0 0
        %1020 = vmatpush1.bf16.msra.mxu0 0
        %1021 = vmatprep.subr.bf16.mxu0 0
        %1022 = vmatpush1.bf16.msra.mxu0 0
        %1023 = vmatprep.subr.bf16.mxu0 0
        %1024 = vmatpush1.bf16.msra.mxu0 0
        %1025 = vmatprep.subr.bf16.mxu0 0
        %1026 = vmatpush1.bf16.msra.mxu0 0
        %1027 = vmatprep.subr.bf16.mxu0 0
        %1028 = vmatpush1.bf16.msra.mxu0 0
        %1029 = vmatprep.subr.bf16.mxu0 0
        %1030 = vmatpush1.bf16.msra.mxu0 0
        %1031 = vmatprep.subr.bf16.mxu0 0
        %1032 = vmatpush1.bf16.msra.mxu0 0
        %1033 = vmatprep.subr.bf16.mxu0 0
        %1034 = vmatpush1.bf16.msra.mxu0 0
        %1035 = vmatprep.subr.bf16.mxu0 0
        %1036 = vmatpush1.bf16.msra.mxu0 0
        %1037 = vmatprep.subr.bf16.mxu0 0
        %1038 = vmatpush1.bf16.msra.mxu0 0
        %1039 = vmatprep.subr.bf16.mxu0 0
        %1040 = vmatpush1.bf16.msra.mxu0 0
        %1041 = vmatprep.mubr.bf16.mxu0 0
        %1042 = vmatmul.mubr.bf16.gmra.mrb[0].mxu0 %v998
        %v1043 = vpop.f32.mrb[0].mxu0
        %v1044 = vadd.f32 0.0, %v1043
        %v1045 = vpop.f32.mrb[0].mxu0
        %v1046 = vadd.f32 0.0, %v1045
        %v1047 = vpop.f32.mrb[0].mxu0
        %v1048 = vpop.f32.mrb[0].mxu0
        %1049 = vdwg.mxu0
        %1050 = vmatprep.subr.bf16.mxu0 0
        %1051 = vmatpush1.bf16.msra.mxu0 %v1007
        %1052 = vmatprep.subr.bf16.mxu0 0
        %1053 = vmatpush1.bf16.msra.mxu0 0
        %1054 = vmatprep.subr.bf16.mxu0 0
        %1055 = vmatpush1.bf16.msra.mxu0 0
        %1056 = vmatprep.subr.bf16.mxu0 0
        %1057 = vmatpush1.bf16.msra.mxu0 0
        %1058 = vmatprep.subr.bf16.mxu0 0
        %1059 = vmatpush1.bf16.msra.mxu0 0
        %1060 = vmatprep.subr.bf16.mxu0 0
        %1061 = vmatpush1.bf16.msra.mxu0 0
        %1062 = vmatprep.subr.bf16.mxu0 0
        %1063 = vmatpush1.bf16.msra.mxu0 0
        %1064 = vmatprep.subr.bf16.mxu0 0
        %1065 = vmatpush1.bf16.msra.mxu0 0
        %1066 = vmatprep.subr.bf16.mxu0 0
        %1067 = vmatpush1.bf16.msra.mxu0 0
        %1068 = vmatprep.subr.bf16.mxu0 0
        %1069 = vmatpush1.bf16.msra.mxu0 0
        %1070 = vmatprep.subr.bf16.mxu0 0
        %1071 = vmatpush1.bf16.msra.mxu0 0
        %1072 = vmatprep.subr.bf16.mxu0 0
        %1073 = vmatpush1.bf16.msra.mxu0 0
        %1074 = vmatprep.subr.bf16.mxu0 0
        %1075 = vmatpush1.bf16.msra.mxu0 0
        %1076 = vmatprep.subr.bf16.mxu0 0
        %1077 = vmatpush1.bf16.msra.mxu0 0
        %1078 = vmatprep.subr.bf16.mxu0 0
        %1079 = vmatpush1.bf16.msra.mxu0 0
        %1080 = vmatprep.subr.bf16.mxu0 0
        %1081 = vmatpush1.bf16.msra.mxu0 0
        %1082 = vmatprep.mubr.bf16.mxu0 0
        %1083 = vmatmul.mubr.bf16.gmra.mrb[0].mxu0 %v998
        %v1084 = vpop.f32.mrb[0].mxu0
        %v1085 = vadd.f32 0.0, %v1084
        %v1086 = vpop.f32.mrb[0].mxu0
        %v1087 = vpop.f32.mrb[0].mxu0
        %v1088 = vpop.f32.mrb[0].mxu0
        %1089 = vdwg.mxu0
        %v1090 = vadd.f32 %v983, %v1044
        %v1091 = vadd.f32 %v984, %v1046
        %v1092 = vadd.f32 %v985, %v1085
        %s1093 = scalar_lea.vmem %s1, 32
        %v1094 = vld [vmem:[%s1093] sm:$0xf]
        %1095 = vrot.lane.b32.xlu0 %v245, 90
        %v1096 = vpop.permute.xlu0 %1095
        %1097 = vrot.lane.b32.xlu0 %v253, 90
        %v1098 = vpop.permute.xlu0 %1097
        %1099 = vrot.lane.b32.xlu0 %v252, 90
        %v1100 = vpop.permute.xlu0 %1099
        %vm1101 = vcmask 736256
        %v1102 = vsel %vm1101, %v1096, %v1098
        %v1103 = vsel %vm1101, %v1098, %v1100
        %v1105 = vsel %vm263, %v1094, 0
        %v1108 = vsel %vm267, %v1102, 0
        %v1111 = vsel %vm267, %v1103, 0
        %v1114 = vsel %vm267, %v1100, 0
        %1116 = vmatprep.subr.bf16.mxu0 %v1111
        %1117 = vmatpush1.bf16.msra.mxu0 %v1108
        %1118 = vmatprep.subr.bf16.mxu0 0
        %1119 = vmatpush1.bf16.msra.mxu0 0
        %1120 = vmatprep.subr.bf16.mxu0 0
        %1121 = vmatpush1.bf16.msra.mxu0 0
        %1122 = vmatprep.subr.bf16.mxu0 0
        %1123 = vmatpush1.bf16.msra.mxu0 0
        %1124 = vmatprep.subr.bf16.mxu0 0
        %1125 = vmatpush1.bf16.msra.mxu0 0
        %1126 = vmatprep.subr.bf16.mxu0 0
        %1127 = vmatpush1.bf16.msra.mxu0 0
        %1128 = vmatprep.subr.bf16.mxu0 0
        %1129 = vmatpush1.bf16.msra.mxu0 0
        %1130 = vmatprep.subr.bf16.mxu0 0
        %1131 = vmatpush1.bf16.msra.mxu0 0
        %1132 = vmatprep.subr.bf16.mxu0 0
        %1133 = vmatpush1.bf16.msra.mxu0 0
        %1134 = vmatprep.subr.bf16.mxu0 0
        %1135 = vmatpush1.bf16.msra.mxu0 0
        %1136 = vmatprep.subr.bf16.mxu0 0
        %1137 = vmatpush1.bf16.msra.mxu0 0
        %1138 = vmatprep.subr.bf16.mxu0 0
        %1139 = vmatpush1.bf16.msra.mxu0 0
        %1140 = vmatprep.subr.bf16.mxu0 0
        %1141 = vmatpush1.bf16.msra.mxu0 0
        %1142 = vmatprep.subr.bf16.mxu0 0
        %1143 = vmatpush1.bf16.msra.mxu0 0
        %1144 = vmatprep.subr.bf16.mxu0 0
        %1145 = vmatpush1.bf16.msra.mxu0 0
        %1146 = vmatprep.subr.bf16.mxu0 0
        %1147 = vmatpush1.bf16.msra.mxu0 0
        %1148 = vmatprep.mubr.bf16.mxu0 0
        %1149 = vmatmul.mubr.bf16.gmra.mrb[0].mxu0 %v1105
        %v1150 = vpop.f32.mrb[0].mxu0
        %v1151 = vadd.f32 0.0, %v1150
        %v1152 = vpop.f32.mrb[0].mxu0
        %v1153 = vadd.f32 0.0, %v1152
        %v1154 = vpop.f32.mrb[0].mxu0
        %v1155 = vpop.f32.mrb[0].mxu0
        %1156 = vdwg.mxu0
        %1157 = vmatprep.subr.bf16.mxu0 0
        %1158 = vmatpush1.bf16.msra.mxu0 %v1114
        %1159 = vmatprep.subr.bf16.mxu0 0
        %1160 = vmatpush1.bf16.msra.mxu0 0
        %1161 = vmatprep.subr.bf16.mxu0 0
        %1162 = vmatpush1.bf16.msra.mxu0 0
        %1163 = vmatprep.subr.bf16.mxu0 0
        %1164 = vmatpush1.bf16.msra.mxu0 0
        %1165 = vmatprep.subr.bf16.mxu0 0
        %1166 = vmatpush1.bf16.msra.mxu0 0
        %1167 = vmatprep.subr.bf16.mxu0 0
        %1168 = vmatpush1.bf16.msra.mxu0 0
        %1169 = vmatprep.subr.bf16.mxu0 0
        %1170 = vmatpush1.bf16.msra.mxu0 0
        %1171 = vmatprep.subr.bf16.mxu0 0
        %1172 = vmatpush1.bf16.msra.mxu0 0
        %1173 = vmatprep.subr.bf16.mxu0 0
        %1174 = vmatpush1.bf16.msra.mxu0 0
        %1175 = vmatprep.subr.bf16.mxu0 0
        %1176 = vmatpush1.bf16.msra.mxu0 0
        %1177 = vmatprep.subr.bf16.mxu0 0
        %1178 = vmatpush1.bf16.msra.mxu0 0
        %1179 = vmatprep.subr.bf16.mxu0 0
        %1180 = vmatpush1.bf16.msra.mxu0 0
        %1181 = vmatprep.subr.bf16.mxu0 0
        %1182 = vmatpush1.bf16.msra.mxu0 0
        %1183 = vmatprep.subr.bf16.mxu0 0
        %1184 = vmatpush1.bf16.msra.mxu0 0
        %1185 = vmatprep.subr.bf16.mxu0 0
        %1186 = vmatpush1.bf16.msra.mxu0 0
        %1187 = vmatprep.subr.bf16.mxu0 0
        %1188 = vmatpush1.bf16.msra.mxu0 0
        %1189 = vmatprep.mubr.bf16.mxu0 0
        %1190 = vmatmul.mubr.bf16.gmra.mrb[0].mxu0 %v1105
        %v1191 = vpop.f32.mrb[0].mxu0
        %v1192 = vadd.f32 0.0, %v1191
        %v1193 = vpop.f32.mrb[0].mxu0
        %v1194 = vpop.f32.mrb[0].mxu0
        %v1195 = vpop.f32.mrb[0].mxu0
        %1196 = vdwg.mxu0
        %v1197 = vadd.f32 %v1090, %v1151
        %v1198 = vadd.f32 %v1091, %v1153
        %v1199 = vadd.f32 %v1092, %v1192
        %v1200 = vld [vmem:[#allocation2] sm:$0xff]
        %v1201 = vld [vmem:[#allocation2 + $0x8] sm:$0xff]
        %v1202 = vld [vmem:[#allocation2 + $0x10] sm:$0xff]
        %v1203 = vmul.f32 %v1200, 0.5
        %v1204 = vmul.f32 %v1201, 0.5
        %v1205 = vmul.f32 %v1202, 0.5
        %v1206 = vadd.f32 %v1203, %v1197
        %v1207 = vadd.f32 %v1204, %v1198
        %v1208 = vadd.f32 %v1205, %v1199
        %v1209 = vstv %s222
        %v1210 = vmul.f32 %v1206, %v1209
        %v1211 = vmul.f32 %v1207, %v1209
        %v1212 = vmul.f32 %v1208, %v1209
        %v1213 = vstv %s223
        %v1214 = vadd.f32 %v1210, %v1213
        %v1215 = vadd.f32 %v1211, %v1213
        %v1216 = vadd.f32 %v1212, %v1213
        %v1217 = vstv %s224
        %vm1218 = vcmp.ge.f32.partialorder %v1214, %v1217
        %vm1219 = vcmp.ge.f32.partialorder %v1215, %v1217
        %vm1220 = vcmp.ge.f32.partialorder %v1216, %v1217
        %v1221 = vsel %vm1218, 1, 0
        %v1222 = vsel %vm1219, 1, 0
        %v1223 = vsel %vm1220, 1, 0
        %v1224 = vcvt.s32.f32 %v1221
        %v1225 = vcvt.s32.f32 %v1222
        %v1226 = vcvt.s32.f32 %v1223
        %v1227 = vpack.c.bf16 %v1224, %v1224
        %v1228 = vpack.c.bf16 %v1225, %v1225
        %v1229 = vpack.c.bf16 %v1226, %v1226
        %v1233 = vunpack.c.l.b16 %v1227
        %v1234 = vunpack.c.l.b16 %v1228
        %v1235 = vunpack.c.l.b16 %v1229
        %v1236 = vpack.c.b16 %v1234, %v1233
        %v1237 = vpack.c.b16 %v1235, %v1235
        %1240 = vst [vmem:[%s220] sm:$0xff] %v1236
        %vm1241 = vcmask 257024
        %1242 = vst.msk [vmem:[%s220 + $0x8] sm:$0xf] %vm1241, %v1237
        %v1243 = vmul.f32 %v1224, %v1206
        %v1244 = vmul.f32 %v1225, %v1207
        %v1245 = vmul.f32 %v1226, %v1208
        %v1246 = vsub.f32 %v1206, %v1243
        %v1247 = vsub.f32 %v1207, %v1244
        %v1248 = vsub.f32 %v1208, %v1245
        %1249 = vst [vmem:[#allocation2] sm:$0xff] %v1246
        %1250 = vst [vmem:[#allocation2 + $0x8] sm:$0xff] %v1247
        %vm1251 = vcmask 261120
        %1252 = vst.msk [vmem:[#allocation2 + $0x10] sm:$0xff] %vm1251, %v1248
        %p1253 = scmp.lt.s32.totalorder %s20, 7
        %s1254 = scalar_select %p1253, %s20, 7
        %p1255 = scmp.lt.s32.totalorder %s19, 3
        %s1256 = scalar_select %p1255, %s19, 3
        %s1257 = smul.addr %s1256, 3
        %s1258 = smul.addr %s1254, 12
        %s1259 = sadd.s32 %s1257, %s1258
        %s1260 = smul.addr %s1259, 4
        %s1261 = scalar_lea.vmem %s3, %s1260
        // Predicated region
        $region41: #{qconv2d_lif_forward.1} parent=31 // pred_check
          %p1262 = pneg %p117
        $region42: #{qconv2d_lif_forward.1} parent=31 // pred_check_branch
          %1264 = sbr.rel (%p1262) target = $region44
        $region43: #{qconv2d_lif_forward.1} parent=31 // pred_region
          _
        $region44: #{qconv2d_lif_forward.1} parent=31 // pred_fallthru
          _
      $region32: #{qconv2d_lif_forward.1} parent=5 // pred_fallthru
        _
      %p1265 = scmp.le.s32.totalorder 2, %s10
      // Predicated region
      $region45: #{qconv2d_lif_forward.1} parent=5 // pred_check
        %p1266 = pneg %p1265
      $region46: #{qconv2d_lif_forward.1} parent=5 // pred_check_branch
        %1268 = sbr.rel (%p1266) target = $region48
      $region47: #{qconv2d_lif_forward.1} parent=5 // pred_region
        %s1269 = ssub.s32 %s10, 2
        // Predicated region
        $region49: #{qconv2d_lif_forward.1} parent=47 // pred_check
          %p1270 = pneg %p123
        $region50: #{qconv2d_lif_forward.1} parent=47 // pred_check_branch
          %1272 = sbr.rel (%p1270) target = $region52
        $region51: #{qconv2d_lif_forward.1} parent=47 // pred_region
          %p1273 = scmp.lt.s32.totalorder %s22, 7
          %s1274 = scalar_select %p1273, %s22, 7
          %p1275 = scmp.lt.s32.totalorder %s21, 3
          %s1276 = scalar_select %p1275, %s21, 3
          %s1277 = smul.addr %s1276, 3
          %s1278 = smul.addr %s1274, 12
          %s1279 = sadd.s32 %s1277, %s1278
          %s1280 = smul.addr %s1279, 4
          %s1281 = scalar_lea.vmem %s3, %s1280
        $region52: #{qconv2d_lif_forward.1} parent=47 // pred_fallthru
          _
      $region48: #{qconv2d_lif_forward.1} parent=5 // pred_fallthru
        _
    $region6: #{qconv2d_lif_forward.1} parent=1 // loop_footer
      %s14 = sadd.s32 1, %s10
    $region7: #{qconv2d_lif_forward.1} parent=1 // loop_footer_branch
      %9 = sbr.rel target = $region3
    $region8: #{qconv2d_lif_forward.1} parent=1 // loop_exit
      _
    %1282 = vsyncpa [#allocation4], 1
    %s1283 = scalar_lea.sflag [#allocation4], 1
    %1284 = vsyncpa %s1283, 1

</llo_original>
